<compile_context>
chip_gen: v7x
topology: tpu7x:2x2x1
jax: 0.10.0
libtpu: 0.0.40
codegen_flags: <defaults>
</compile_context>

<pallas_src>
import jax
import jax.numpy as jnp
from jax.experimental import pallas as pl
from jax.experimental.pallas import tpu as pltpu

NEG_SLOPE = 0.2        # GATConv default LeakyReLU negative slope
MASK_VAL = -1e30       # large-but-finite mask for softmax max-subtraction

# packed bf16 weight-slab row offsets (all 16-row aligned, 128 lanes wide)
_W2A_ROWS = (0, 32)      # W2_aug (32,66)  -> rows   0:32
_W3_ROWS = (32, 96)      # W3     (64,128) -> rows  32:96
_W4A_ROWS = (96, 224)    # W4_aug (128,4)  -> rows  96:224
_W1_ROWS = (224, 240)    # W1     (7,32)   -> rows 224:240


def gnn_kernel(x_ref, e_ref, w_ref, b_ref, out_ref):
    N = x_ref.shape[0]
    E = e_ref.shape[1]

    x = x_ref[...]                         # (N, 16) f32, cols 7:16 zero
    edges = e_ref[...]                     # (2, E)  int32  [src; dst]

    # ---- densify adjacency on the MXU: adj[i, j] = #edges j -> i
    node = jax.lax.broadcasted_iota(jnp.int32, (N, E), 0)
    src_ohT = (node == edges[0:1, :]).astype(jnp.float32)          # (N, E)
    dst_ohT = (node == edges[1:2, :]).astype(jnp.float32)          # (N, E)
    adj = jax.lax.dot_general(dst_ohT, src_ohT, (((1,), (1,)), ((), ())),
                              preferred_element_type=jnp.float32)  # (N, N)
    # PyG remove_self_loops + add_self_loops: force exactly one self loop/node
    row = jax.lax.broadcasted_iota(jnp.int32, (N, N), 0)
    col = jax.lax.broadcasted_iota(jnp.int32, (N, N), 1)
    adj = jnp.where(row == col, 1.0, adj)

    # hoisted once, reused by both GAT layers
    mask = adj > 0.0

    # ---- GCN symmetric normalization, a_hat never materialized
    deg = jnp.sum(adj, axis=1, keepdims=True)                      # (N, 1)
    dinv = jax.lax.rsqrt(jnp.maximum(deg, 1.0))                    # (N, 1)

    # static slices of the packed parameter blocks (zero-cost ref views)
    w2a = w_ref[_W2A_ROWS[0]:_W2A_ROWS[1], :]                      # (32, 128) bf16
    w3 = w_ref[_W3_ROWS[0]:_W3_ROWS[1], :]                         # (64, 128) bf16
    w4a = w_ref[_W4A_ROWS[0]:_W4A_ROWS[1], :]                      # (128,128) bf16
    w1 = w_ref[_W1_ROWS[0]:_W1_ROWS[1], :]                         # (16, 128) bf16
    b1 = b_ref[0:1, :]                                             # (1, 128) f32
    b2 = b_ref[1:2, :]
    b3 = b_ref[2:3, :]
    b4 = b_ref[3:4, :]

    def mm(h, w_bf16):
        # bf16 x bf16 MXU matmul with f32 accumulation
        return jnp.dot(h.astype(jnp.bfloat16), w_bf16,
                       preferred_element_type=jnp.float32)

    def gcn(h, w, b):
        hw = mm(h, w)                                              # (N, 128) f32
        # D^-1/2 (A+I) D^-1/2 @ hw  ==  dinv * ((A+I) @ (dinv * hw))
        return dinv * jnp.dot(adj, dinv * hw,
                              preferred_element_type=jnp.float32) + b

    def gat(h, w_aug, b, f_out):
        # single MXU pass gives hw (cols 0:f_out) and both attention
        # projections (cols f_out, f_out+1): W_aug = [W | W@a_src.T | W@a_dst.T]
        hw = mm(h, w_aug)                                          # (N, 128) f32
        alpha_src = hw[:, f_out:f_out + 1]                         # (N, 1)
        alpha_dst = hw[:, f_out + 1:f_out + 2]                     # (N, 1)
        # e[i, j] = LeakyReLU(alpha_dst_i + alpha_src_j)
        e = alpha_dst + alpha_src.T                                # (N, N)
        e = jnp.where(e > 0, e, NEG_SLOPE * e)
        e = jnp.where(mask, e, MASK_VAL)
        e = e - jnp.max(e, axis=1, keepdims=True)
        # adj carries edge multiplicity and zeroes non-edges
        p = adj * jnp.exp(e)
        p = p * pl.reciprocal(jnp.sum(p, axis=1, keepdims=True), approx=True)
        # stray alpha lanes (f_out, f_out+1) in the result are excluded by the
        # explicit activation slices before the next contraction / output mask.
        return jnp.dot(p, hw, preferred_element_type=jnp.float32) + b

    h = jnp.maximum(gcn(x, w1, b1), 0.0)                 # GCNConv(7, 32)  + relu (lanes 0:32)
    h = jnp.maximum(gat(h[:, :32], w2a, b2, 64), 0.0)    # GATConv(32, 64) + relu (lanes 0:64)
    h = jnp.maximum(gcn(h[:, :64], w3, b3), 0.0)         # GCNConv(64,128) + relu (lanes 0:128)
    h = gat(h, w4a, b4, 2)                               # GATConv(128, 2) -> logits in lanes 0:2

    # log_softmax over dim=1, restricted to the 2 real output lanes;
    # emit a full lane-dense (N, 128) block (wrapper slices [:, :2]).
    lane = jax.lax.broadcasted_iota(jnp.int32, h.shape, 1)
    lmask = lane < 2
    m = jnp.max(jnp.where(lmask, h, MASK_VAL), axis=1, keepdims=True)
    z = h - m
    ez = jnp.where(lmask, jnp.exp(z), 0.0)
    lse = jnp.log(jnp.sum(ez, axis=1, keepdims=True))
    out_ref[...] = jnp.where(lmask, z - lse, 0.0)


def init_params(key):
    def glorot(key, shape):
        fan_in, fan_out = shape[-2], shape[-1]
        limit = jnp.sqrt(6.0 / (fan_in + fan_out))
        return jax.random.uniform(key, shape, jnp.float32, -limit, limit)

    ks = jax.random.split(key, 10)
    params = (
        glorot(ks[0], (7, 32)),    jnp.zeros((1, 32), jnp.float32),     # conv1 (GCN)  W, b
        glorot(ks[1], (32, 64)),   glorot(ks[2], (1, 64)),              # conv2 (GAT)  W, att_src
        glorot(ks[3], (1, 64)),    jnp.zeros((1, 64), jnp.float32),     #              att_dst, b
        glorot(ks[4], (64, 128)),  jnp.zeros((1, 128), jnp.float32),    # conv3 (GCN)  W, b
        glorot(ks[5], (128, 2)),   glorot(ks[6], (1, 2)),               # conv4 (GAT)  W, att_src
        glorot(ks[7], (1, 2)),     jnp.zeros((1, 2), jnp.float32),      #              att_dst, b
    )
    # NOTE: conv5 = GATConv(256, 2) from __init__ is never used in forward(); omitted.
    return params


def pack_params(params):
    """Pack weights into a (240, 128) bf16 slab (true K extents, 16-row aligned
    blocks) and the four biases into a small (8, 128) f32 block."""
    (w1, b1, w2, a2s, a2d, b2, w3, b3, w4, a4s, a4d, b4) = params

    def pad(a, rows, cols=128):
        return jnp.pad(a, ((0, rows - a.shape[0]), (0, cols - a.shape[1])))

    # fold GAT attention projections into the weight matmul
    w2_aug = jnp.concatenate([w2, w2 @ a2s.T, w2 @ a2d.T], axis=1)   # (32, 66)
    w4_aug = jnp.concatenate([w4, w4 @ a4s.T, w4 @ a4d.T], axis=1)   # (128, 4)

    w_slab = jnp.concatenate([
        pad(w2_aug, 32),       # rows   0:32
        pad(w3, 64),           # rows  32:96
        pad(w4_aug, 128),      # rows  96:224
        pad(w1, 16),           # rows 224:240
    ], axis=0).astype(jnp.bfloat16)                                  # (240, 128) bf16

    biases = jnp.concatenate(
        [pad(b1, 1), pad(b2, 1), pad(b3, 1), pad(b4, 1),
         jnp.zeros((4, 128), jnp.float32)], axis=0)                  # (8, 128) f32
    return w_slab, biases


@jax.jit
def net_forward(x, edge_index, w_slab, biases):
    N = x.shape[0]
    # feature pad to the slab's 16-row W1 block (kept in the wrapper: a single
    # trivial XLA op; adjacency densification now lives inside the kernel).
    x_p = jnp.pad(x.astype(jnp.float32), ((0, 0), (0, 16 - x.shape[1])))   # (N, 16)

    vmem = pl.BlockSpec(memory_space=pltpu.MemorySpace.VMEM)
    out_padded = pl.pallas_call(
        gnn_kernel,
        out_shape=jax.ShapeDtypeStruct((N, 128), jnp.float32),
        in_specs=[vmem, vmem, vmem, vmem],
        out_specs=vmem,
    )(x_p, edge_index.astype(jnp.int32), w_slab, biases)
    return out_padded[:, :2]


if __name__ == "__main__":
    key = jax.random.PRNGKey(0)
    k_x, k_e, k_p = jax.random.split(key, 3)

    N, F_IN, E = 16, 7, 48
    x = jax.random.normal(k_x, (N, F_IN), jnp.float32)
    edge_index = jax.random.randint(k_e, (2, E), 0, N, jnp.int32)

    params = init_params(k_p)
    w_slab, biases = pack_params(params)

    out = net_forward(x, edge_index, w_slab, biases)
    jax.block_until_ready(out)

    assert out.shape == (N, 2)
    # rows of log_softmax must exp-sum to 1
    assert jnp.allclose(jnp.sum(jnp.exp(out), axis=1), 1.0, atol=1e-4)
    print("KERNEL_OK")
</pallas_src>

<mosaic_0001>
module attributes {stable_mosaic.version = 11 : i64} {
  func.func @gnn_kernel(%arg0: memref<16x16xf32, #tpu.memory_space<vmem>>, %arg1: memref<2x48xi32, #tpu.memory_space<vmem>>, %arg2: memref<240x128xbf16, #tpu.memory_space<vmem>>, %arg3: memref<8x128xf32, #tpu.memory_space<vmem>>, %arg4: memref<16x128xf32, #tpu.memory_space<vmem>>) attributes {dimension_semantics = [], scalar_prefetch = 0 : i64, scratch_operands = 0 : i64, tpu.core_type = #tpu.core_type<tc>} {
    %c0 = arith.constant 0 : index
    %c0_0 = arith.constant 0 : index
    %0 = vector.load %arg0[%c0, %c0_0] : memref<16x16xf32, #tpu.memory_space<vmem>>, vector<16x16xf32>
    %c0_1 = arith.constant 0 : index
    %c0_2 = arith.constant 0 : index
    %1 = vector.load %arg1[%c0_1, %c0_2] : memref<2x48xi32, #tpu.memory_space<vmem>>, vector<2x48xi32>
    %2 = tpu.iota {dimensions = array<i32: 0>} : vector<16x48xi32>
    %3 = vector.extract_strided_slice %1 {offsets = [0, 0], sizes = [1, 48], strides = [1, 1]} : vector<2x48xi32> to vector<1x48xi32>
    %4 = vector.broadcast %3 : vector<1x48xi32> to vector<16x48xi32>
    %5 = arith.cmpi eq, %2, %4 : vector<16x48xi32>
    %6 = arith.extui %5 : vector<16x48xi1> to vector<16x48xi32>
    %7 = arith.sitofp %6 : vector<16x48xi32> to vector<16x48xf32>
    %8 = vector.extract_strided_slice %1 {offsets = [1, 0], sizes = [1, 48], strides = [1, 1]} : vector<2x48xi32> to vector<1x48xi32>
    %9 = vector.broadcast %8 : vector<1x48xi32> to vector<16x48xi32>
    %10 = arith.cmpi eq, %2, %9 : vector<16x48xi32>
    %11 = arith.extui %10 : vector<16x48xi1> to vector<16x48xi32>
    %12 = arith.sitofp %11 : vector<16x48xi32> to vector<16x48xf32>
    %cst = arith.constant dense<0.000000e+00> : vector<16x16xf32>
    %13 = tpu.matmul %12, %7, %cst {dimension_numbers = #tpu.dot_dimension_numbers<[1], [1], [0], [0], [0, 0, 1, 0], [], []>} : vector<16x48xf32>, vector<16x48xf32>, vector<16x16xf32> -> vector<16x16xf32>
    %14 = tpu.iota {dimensions = array<i32: 0>} : vector<16x16xi32>
    %15 = tpu.iota {dimensions = array<i32: 1>} : vector<16x16xi32>
    %16 = arith.cmpi eq, %14, %15 : vector<16x16xi32>
    %cst_3 = arith.constant 1.000000e+00 : f32
    %17 = vector.broadcast %cst_3 : f32 to vector<16x16xf32>
    %18 = arith.select %16, %17, %13 : vector<16x16xi1>, vector<16x16xf32>
    %cst_4 = arith.constant 0.000000e+00 : f32
    %19 = vector.broadcast %cst_4 : f32 to vector<16x16xf32>
    %20 = arith.cmpf ogt, %18, %19 : vector<16x16xf32>
    %cst_5 = arith.constant dense<0.000000e+00> : vector<16xf32>
    %21 = vector.multi_reduction <add>, %18, %cst_5 [1] : vector<16x16xf32> to vector<16xf32>
    %22 = vector.shape_cast %21 : vector<16xf32> to vector<16x1xf32>
    %cst_6 = arith.constant 1.000000e+00 : f32
    %23 = vector.broadcast %cst_6 : f32 to vector<16x1xf32>
    %24 = arith.maximumf %22, %23 : vector<16x1xf32>
    %25 = math.rsqrt %24 : vector<16x1xf32>
    %c0_7 = arith.constant 0 : index
    %c0_8 = arith.constant 0 : index
    %26 = vector.load %arg2[%c0_7, %c0_8] : memref<240x128xbf16, #tpu.memory_space<vmem>>, vector<32x128xbf16>
    %c32 = arith.constant 32 : index
    %c0_9 = arith.constant 0 : index
    %27 = vector.load %arg2[%c32, %c0_9] : memref<240x128xbf16, #tpu.memory_space<vmem>>, vector<64x128xbf16>
    %c96 = arith.constant 96 : index
    %c0_10 = arith.constant 0 : index
    %28 = vector.load %arg2[%c96, %c0_10] : memref<240x128xbf16, #tpu.memory_space<vmem>>, vector<128x128xbf16>
    %c224 = arith.constant 224 : index
    %c0_11 = arith.constant 0 : index
    %29 = vector.load %arg2[%c224, %c0_11] : memref<240x128xbf16, #tpu.memory_space<vmem>>, vector<16x128xbf16>
    %c0_12 = arith.constant 0 : index
    %c0_13 = arith.constant 0 : index
    %30 = vector.load %arg3[%c0_12, %c0_13] : memref<8x128xf32, #tpu.memory_space<vmem>>, vector<1x128xf32>
    %c1 = arith.constant 1 : index
    %c0_14 = arith.constant 0 : index
    %31 = vector.load %arg3[%c1, %c0_14] : memref<8x128xf32, #tpu.memory_space<vmem>>, vector<1x128xf32>
    %c2 = arith.constant 2 : index
    %c0_15 = arith.constant 0 : index
    %32 = vector.load %arg3[%c2, %c0_15] : memref<8x128xf32, #tpu.memory_space<vmem>>, vector<1x128xf32>
    %c3 = arith.constant 3 : index
    %c0_16 = arith.constant 0 : index
    %33 = vector.load %arg3[%c3, %c0_16] : memref<8x128xf32, #tpu.memory_space<vmem>>, vector<1x128xf32>
    %34 = arith.truncf %0 : vector<16x16xf32> to vector<16x16xbf16>
    %cst_17 = arith.constant dense<0.000000e+00> : vector<16x128xf32>
    %35 = tpu.matmul %34, %29, %cst_17 {dimension_numbers = #tpu.dot_dimension_numbers<[1], [0], [0], [1], [0, 0, 1, 1], [], []>} : vector<16x16xbf16>, vector<16x128xbf16>, vector<16x128xf32> -> vector<16x128xf32>
    %36 = vector.broadcast %25 : vector<16x1xf32> to vector<16x128xf32>
    %37 = arith.mulf %36, %35 : vector<16x128xf32>
    %cst_18 = arith.constant dense<0.000000e+00> : vector<16x128xf32>
    %38 = tpu.matmul %18, %37, %cst_18 {dimension_numbers = #tpu.dot_dimension_numbers<[1], [0], [0], [1], [0, 0, 1, 1], [], []>} : vector<16x16xf32>, vector<16x128xf32>, vector<16x128xf32> -> vector<16x128xf32>
    %39 = vector.broadcast %25 : vector<16x1xf32> to vector<16x128xf32>
    %40 = arith.mulf %39, %38 : vector<16x128xf32>
    %41 = vector.broadcast %30 : vector<1x128xf32> to vector<16x128xf32>
    %42 = arith.addf %40, %41 : vector<16x128xf32>
    %cst_19 = arith.constant 0.000000e+00 : f32
    %43 = vector.broadcast %cst_19 : f32 to vector<16x128xf32>
    %44 = arith.maximumf %42, %43 : vector<16x128xf32>
    %45 = vector.extract_strided_slice %44 {offsets = [0, 0], sizes = [16, 32], strides = [1, 1]} : vector<16x128xf32> to vector<16x32xf32>
    %46 = arith.truncf %45 : vector<16x32xf32> to vector<16x32xbf16>
    %cst_20 = arith.constant dense<0.000000e+00> : vector<16x128xf32>
    %47 = tpu.matmul %46, %26, %cst_20 {dimension_numbers = #tpu.dot_dimension_numbers<[1], [0], [0], [1], [0, 0, 1, 1], [], []>} : vector<16x32xbf16>, vector<32x128xbf16>, vector<16x128xf32> -> vector<16x128xf32>
    %48 = vector.extract_strided_slice %47 {offsets = [0, 64], sizes = [16, 1], strides = [1, 1]} : vector<16x128xf32> to vector<16x1xf32>
    %49 = vector.extract_strided_slice %47 {offsets = [0, 65], sizes = [16, 1], strides = [1, 1]} : vector<16x128xf32> to vector<16x1xf32>
    %50 = tpu.transpose %48, [1, 0] : vector<16x1xf32> -> vector<1x16xf32>
    %51 = vector.broadcast %49 : vector<16x1xf32> to vector<16x16xf32>
    %52 = vector.broadcast %50 : vector<1x16xf32> to vector<16x16xf32>
    %53 = arith.addf %51, %52 : vector<16x16xf32>
    %cst_21 = arith.constant 0.000000e+00 : f32
    %54 = vector.broadcast %cst_21 : f32 to vector<16x16xf32>
    %55 = arith.cmpf ogt, %53, %54 : vector<16x16xf32>
    %cst_22 = arith.constant 2.000000e-01 : f32
    %56 = vector.broadcast %cst_22 : f32 to vector<16x16xf32>
    %57 = arith.mulf %56, %53 : vector<16x16xf32>
    %58 = arith.select %55, %53, %57 : vector<16x16xi1>, vector<16x16xf32>
    %cst_23 = arith.constant -1.000000e+30 : f32
    %59 = vector.broadcast %cst_23 : f32 to vector<16x16xf32>
    %60 = arith.select %20, %58, %59 : vector<16x16xi1>, vector<16x16xf32>
    %cst_24 = arith.constant dense<0xFF800000> : vector<16xf32>
    %61 = vector.multi_reduction <maximumf>, %60, %cst_24 [1] : vector<16x16xf32> to vector<16xf32>
    %62 = vector.shape_cast %61 : vector<16xf32> to vector<16x1xf32>
    %63 = vector.broadcast %62 : vector<16x1xf32> to vector<16x16xf32>
    %64 = arith.subf %60, %63 : vector<16x16xf32>
    %65 = math.exp %64 : vector<16x16xf32>
    %66 = arith.mulf %18, %65 : vector<16x16xf32>
    %cst_25 = arith.constant dense<0.000000e+00> : vector<16xf32>
    %67 = vector.multi_reduction <add>, %66, %cst_25 [1] : vector<16x16xf32> to vector<16xf32>
    %68 = vector.shape_cast %67 : vector<16xf32> to vector<16x1xf32>
    %69 = tpu.reciprocal %68 {approx = true} : vector<16x1xf32> -> vector<16x1xf32>
    %70 = vector.broadcast %69 : vector<16x1xf32> to vector<16x16xf32>
    %71 = arith.mulf %66, %70 : vector<16x16xf32>
    %cst_26 = arith.constant dense<0.000000e+00> : vector<16x128xf32>
    %72 = tpu.matmul %71, %47, %cst_26 {dimension_numbers = #tpu.dot_dimension_numbers<[1], [0], [0], [1], [0, 0, 1, 1], [], []>} : vector<16x16xf32>, vector<16x128xf32>, vector<16x128xf32> -> vector<16x128xf32>
    %73 = vector.broadcast %31 : vector<1x128xf32> to vector<16x128xf32>
    %74 = arith.addf %72, %73 : vector<16x128xf32>
    %cst_27 = arith.constant 0.000000e+00 : f32
    %75 = vector.broadcast %cst_27 : f32 to vector<16x128xf32>
    %76 = arith.maximumf %74, %75 : vector<16x128xf32>
    %77 = vector.extract_strided_slice %76 {offsets = [0, 0], sizes = [16, 64], strides = [1, 1]} : vector<16x128xf32> to vector<16x64xf32>
    %78 = arith.truncf %77 : vector<16x64xf32> to vector<16x64xbf16>
    %cst_28 = arith.constant dense<0.000000e+00> : vector<16x128xf32>
    %79 = tpu.matmul %78, %27, %cst_28 {dimension_numbers = #tpu.dot_dimension_numbers<[1], [0], [0], [1], [0, 0, 1, 1], [], []>} : vector<16x64xbf16>, vector<64x128xbf16>, vector<16x128xf32> -> vector<16x128xf32>
    %80 = vector.broadcast %25 : vector<16x1xf32> to vector<16x128xf32>
    %81 = arith.mulf %80, %79 : vector<16x128xf32>
    %cst_29 = arith.constant dense<0.000000e+00> : vector<16x128xf32>
    %82 = tpu.matmul %18, %81, %cst_29 {dimension_numbers = #tpu.dot_dimension_numbers<[1], [0], [0], [1], [0, 0, 1, 1], [], []>} : vector<16x16xf32>, vector<16x128xf32>, vector<16x128xf32> -> vector<16x128xf32>
    %83 = vector.broadcast %25 : vector<16x1xf32> to vector<16x128xf32>
    %84 = arith.mulf %83, %82 : vector<16x128xf32>
    %85 = vector.broadcast %32 : vector<1x128xf32> to vector<16x128xf32>
    %86 = arith.addf %84, %85 : vector<16x128xf32>
    %cst_30 = arith.constant 0.000000e+00 : f32
    %87 = vector.broadcast %cst_30 : f32 to vector<16x128xf32>
    %88 = arith.maximumf %86, %87 : vector<16x128xf32>
    %89 = arith.truncf %88 : vector<16x128xf32> to vector<16x128xbf16>
    %cst_31 = arith.constant dense<0.000000e+00> : vector<16x128xf32>
    %90 = tpu.matmul %89, %28, %cst_31 {dimension_numbers = #tpu.dot_dimension_numbers<[1], [0], [0], [1], [0, 0, 1, 1], [], []>} : vector<16x128xbf16>, vector<128x128xbf16>, vector<16x128xf32> -> vector<16x128xf32>
    %91 = vector.extract_strided_slice %90 {offsets = [0, 2], sizes = [16, 1], strides = [1, 1]} : vector<16x128xf32> to vector<16x1xf32>
    %92 = vector.extract_strided_slice %90 {offsets = [0, 3], sizes = [16, 1], strides = [1, 1]} : vector<16x128xf32> to vector<16x1xf32>
    %93 = tpu.transpose %91, [1, 0] : vector<16x1xf32> -> vector<1x16xf32>
    %94 = vector.broadcast %92 : vector<16x1xf32> to vector<16x16xf32>
    %95 = vector.broadcast %93 : vector<1x16xf32> to vector<16x16xf32>
    %96 = arith.addf %94, %95 : vector<16x16xf32>
    %cst_32 = arith.constant 0.000000e+00 : f32
    %97 = vector.broadcast %cst_32 : f32 to vector<16x16xf32>
    %98 = arith.cmpf ogt, %96, %97 : vector<16x16xf32>
    %cst_33 = arith.constant 2.000000e-01 : f32
    %99 = vector.broadcast %cst_33 : f32 to vector<16x16xf32>
    %100 = arith.mulf %99, %96 : vector<16x16xf32>
    %101 = arith.select %98, %96, %100 : vector<16x16xi1>, vector<16x16xf32>
    %cst_34 = arith.constant -1.000000e+30 : f32
    %102 = vector.broadcast %cst_34 : f32 to vector<16x16xf32>
    %103 = arith.select %20, %101, %102 : vector<16x16xi1>, vector<16x16xf32>
    %cst_35 = arith.constant dense<0xFF800000> : vector<16xf32>
    %104 = vector.multi_reduction <maximumf>, %103, %cst_35 [1] : vector<16x16xf32> to vector<16xf32>
    %105 = vector.shape_cast %104 : vector<16xf32> to vector<16x1xf32>
    %106 = vector.broadcast %105 : vector<16x1xf32> to vector<16x16xf32>
    %107 = arith.subf %103, %106 : vector<16x16xf32>
    %108 = math.exp %107 : vector<16x16xf32>
    %109 = arith.mulf %18, %108 : vector<16x16xf32>
    %cst_36 = arith.constant dense<0.000000e+00> : vector<16xf32>
    %110 = vector.multi_reduction <add>, %109, %cst_36 [1] : vector<16x16xf32> to vector<16xf32>
    %111 = vector.shape_cast %110 : vector<16xf32> to vector<16x1xf32>
    %112 = tpu.reciprocal %111 {approx = true} : vector<16x1xf32> -> vector<16x1xf32>
    %113 = vector.broadcast %112 : vector<16x1xf32> to vector<16x16xf32>
    %114 = arith.mulf %109, %113 : vector<16x16xf32>
    %cst_37 = arith.constant dense<0.000000e+00> : vector<16x128xf32>
    %115 = tpu.matmul %114, %90, %cst_37 {dimension_numbers = #tpu.dot_dimension_numbers<[1], [0], [0], [1], [0, 0, 1, 1], [], []>} : vector<16x16xf32>, vector<16x128xf32>, vector<16x128xf32> -> vector<16x128xf32>
    %116 = vector.broadcast %33 : vector<1x128xf32> to vector<16x128xf32>
    %117 = arith.addf %115, %116 : vector<16x128xf32>
    %118 = tpu.iota {dimensions = array<i32: 1>} : vector<16x128xi32>
    %c2_i32 = arith.constant 2 : i32
    %119 = vector.broadcast %c2_i32 : i32 to vector<16x128xi32>
    %120 = arith.cmpi slt, %118, %119 : vector<16x128xi32>
    %cst_38 = arith.constant -1.000000e+30 : f32
    %121 = vector.broadcast %cst_38 : f32 to vector<16x128xf32>
    %122 = arith.select %120, %117, %121 : vector<16x128xi1>, vector<16x128xf32>
    %cst_39 = arith.constant dense<0xFF800000> : vector<16xf32>
    %123 = vector.multi_reduction <maximumf>, %122, %cst_39 [1] : vector<16x128xf32> to vector<16xf32>
    %124 = vector.shape_cast %123 : vector<16xf32> to vector<16x1xf32>
    %125 = vector.broadcast %124 : vector<16x1xf32> to vector<16x128xf32>
    %126 = arith.subf %117, %125 : vector<16x128xf32>
    %127 = math.exp %126 : vector<16x128xf32>
    %cst_40 = arith.constant 0.000000e+00 : f32
    %128 = vector.broadcast %cst_40 : f32 to vector<16x128xf32>
    %129 = arith.select %120, %127, %128 : vector<16x128xi1>, vector<16x128xf32>
    %cst_41 = arith.constant dense<0.000000e+00> : vector<16xf32>
    %130 = vector.multi_reduction <add>, %129, %cst_41 [1] : vector<16x128xf32> to vector<16xf32>
    %131 = vector.shape_cast %130 : vector<16xf32> to vector<16x1xf32>
    %132 = math.log %131 : vector<16x1xf32>
    %133 = vector.broadcast %132 : vector<16x1xf32> to vector<16x128xf32>
    %134 = arith.subf %126, %133 : vector<16x128xf32>
    %cst_42 = arith.constant 0.000000e+00 : f32
    %135 = vector.broadcast %cst_42 : f32 to vector<16x128xf32>
    %136 = arith.select %120, %134, %135 : vector<16x128xi1>, vector<16x128xf32>
    %c0_43 = arith.constant 0 : index
    %c0_44 = arith.constant 0 : index
    %137 = vector.load %arg4[%c0_43, %c0_44] : memref<16x128xf32, #tpu.memory_space<vmem>>, vector<16x128xf32>
    tpu.vector_store %arg4[%c0_43, %c0_44], %136 {strides = array<i32>} : memref<16x128xf32, #tpu.memory_space<vmem>>, vector<16x128xf32>,
    return
  }
}

</mosaic_0001>

<llo_original>
// kernel: net_forward.1
$region0: #{net_forward.1}
  #allocation0 [shape = 'u32[]', space=smem, size = 0x4, offset = 0x4, fixed_abs, tag = 'smem constant byte address 0x4 - core index']
  #allocation1 [shape = 'u32[144,128]{1,0:T(1,128)}', space=vmem, size = 0x12000, scoped, tag = 'internal scratch']
  %s0 = inlined_call_operand.vmem [shape: f32[16,16], index: 0, kind: input, shape index: {}]
  %s1 = inlined_call_operand.vmem [shape: s32[2,48], index: 1, kind: input, shape index: {}]
  %s2 = inlined_call_operand.hbm [shape: bf16[240,128], index: 2, kind: input, shape index: {}]
  %s3 = inlined_call_operand.vmem [shape: f32[8,128], index: 3, kind: input, shape index: {}]
  %s4 = inlined_call_operand.vmem [shape: f32[16,128], index: 4, kind: output, shape index: {}]
  %s5 = sld [smem:[#allocation0]]
  $region30: #{net_forward.1} parent=0
    _
  %s7 = ssub.s32 1, %s5
  %s8 = scalar_select 0, %s7, %s5
  $region1: #{net_forward.1} parent=0
    #allocation2 [shape = 'u8[61440]{0}', space=vmem, size = 0xf000, scoped, tag = 'input window, operand 2, single buffered']
    #allocation3 [shape = 's32[1]{0}', space=sflag, size = 0x4, scoped, tag = 'scoped memory for net_forward.1']
    %9 = vsyncpa [#allocation3], 0
    // Predicated region
    $region2: #{net_forward.1} parent=1 // pred_check
      _
    $region3: #{net_forward.1} parent=1 // pred_check_branch
      %11 = sbr.rel (0) target = $region5
    $region4: #{net_forward.1} parent=1 // pred_region
      _
    $region5: #{net_forward.1} parent=1 // pred_fallthru
      _
    // Predicated region
    $region6: #{net_forward.1} parent=1 // pred_check
      _
    $region7: #{net_forward.1} parent=1 // pred_check_branch
      %13 = sbr.rel (0) target = $region9
    $region8: #{net_forward.1} parent=1 // pred_region
      _
    $region9: #{net_forward.1} parent=1 // pred_fallthru
      _
    // Predicated region
    $region10: #{net_forward.1} parent=1 // pred_check
      _
    $region11: #{net_forward.1} parent=1 // pred_check_branch
      %15 = sbr.rel (0) target = $region13
    $region12: #{net_forward.1} parent=1 // pred_region
      %s17 = ssub.s32 1920, 1920
      %18 = vsyncadd [#allocation3], %s17
      %s19 = sshll.u32 [#allocation2], 4
      %s20 = int_to_ptr.vmem [resolvable:$true] %s19
      %25 = dma.hbm_to_vmem [thread:$0]  %s2, 1920, %s20, [#allocation3], 64, 64, 4
    $region13: #{net_forward.1} parent=1 // pred_fallthru
      _
    // Predicated region
    $region14: #{net_forward.1} parent=1 // pred_check
      _
    $region15: #{net_forward.1} parent=1 // pred_check_branch
      %27 = sbr.rel (0) target = $region17
    $region16: #{net_forward.1} parent=1 // pred_region
      _
    $region17: #{net_forward.1} parent=1 // pred_fallthru
      _
    // Predicated region
    $region18: #{net_forward.1} parent=1 // pred_check
      _
    $region19: #{net_forward.1} parent=1 // pred_check_branch
      %29 = sbr.rel (0) target = $region21
    $region20: #{net_forward.1} parent=1 // pred_region
      %30 = dma.done [#allocation3], 1920
    $region21: #{net_forward.1} parent=1 // pred_fallthru
      _
    %v32 = vld [vmem:[%s0] sm:$0xff]
    %v33 = vld [vmem:[%s0 + $0x8] sm:$0xff]
    %v34 = vld [vmem:[%s1] sm:$0x3]
    %v35 = vlaneseq
    %v36 = vshrl.u32 %v35, 7
    %v37 = vadd.s32 %v36, 8
    %v38 = vlaneseq
    %v39 = vshrl.u32 %v38, 7
    %v40 = vsub.s32 0, %v39
    %v41 = vrot.slane %v34, %v40
    %vm42 = vcmp.eq.s32.totalorder %v36, %v41
    %vm43 = vcmp.eq.s32.totalorder %v37, %v41
    %v44 = vsel %vm42, 1, 0
    %v45 = vsel %vm43, 1, 0
    %v46 = vcvt.s32.f32 %v44
    %v47 = vcvt.s32.f32 %v45
    %v48 = vlaneseq
    %v49 = vshrl.u32 %v48, 7
    %v50 = vsub.s32 1, %v49
    %v51 = vrot.slane %v34, %v50
    %vm52 = vcmp.eq.s32.totalorder %v36, %v51
    %vm53 = vcmp.eq.s32.totalorder %v37, %v51
    %v54 = vsel %vm52, 1, 0
    %v55 = vsel %vm53, 1, 0
    %v56 = vcvt.s32.f32 %v54
    %v57 = vcvt.s32.f32 %v55
    %vm58 = vcmask 392192
    %v60 = vsel %vm58, %v56, 0
    %v63 = vsel %vm58, %v57, 0
    %v66 = vsel %vm58, %v46, 0
    %v69 = vsel %vm58, %v47, 0
    %71 = vmatprep.subr.mxu0 0.0
    %72 = vmatpush1.xpose.msra.mxu0 %v66
    %73 = vmatprep.subr.mxu0 0.0
    %74 = vmatpush1.xpose.msra.mxu0 %v69
    %75 = vmatprep.subr.mxu0 0.0
    %76 = vmatpush1.xpose.msra.mxu0 0.0
    %77 = vmatprep.subr.mxu0 0.0
    %78 = vmatpush1.xpose.msra.mxu0 0.0
    %79 = vmatprep.subr.mxu0 0.0
    %80 = vmatpush1.xpose.msra.mxu0 0.0
    %81 = vmatprep.subr.mxu0 0.0
    %82 = vmatpush1.xpose.msra.mxu0 0.0
    %83 = vmatprep.subr.mxu0 0.0
    %84 = vmatpush1.xpose.msra.mxu0 0.0
    %85 = vmatprep.subr.mxu0 0.0
    %86 = vmatpush1.xpose.msra.mxu0 0.0
    %87 = vmatprep.subr.mxu0 0.0
    %88 = vmatpush1.xpose.msra.mxu0 0.0
    %89 = vmatprep.subr.mxu0 0.0
    %90 = vmatpush1.xpose.msra.mxu0 0.0
    %91 = vmatprep.subr.mxu0 0.0
    %92 = vmatpush1.xpose.msra.mxu0 0.0
    %93 = vmatprep.subr.mxu0 0.0
    %94 = vmatpush1.xpose.msra.mxu0 0.0
    %95 = vmatprep.subr.mxu0 0.0
    %96 = vmatpush1.xpose.msra.mxu0 0.0
    %97 = vmatprep.subr.mxu0 0.0
    %98 = vmatpush1.xpose.msra.mxu0 0.0
    %99 = vmatprep.subr.mxu0 0.0
    %100 = vmatpush1.xpose.msra.mxu0 0.0
    %101 = vmatprep.subr.mxu0 0.0
    %102 = vmatpush1.xpose.msra.mxu0 0.0
    %103 = vmatprep.subr.mxu0 0.0
    %104 = vmatpush1.xpose.msra.mxu0 0.0
    %105 = vmatprep.subr.mxu0 0.0
    %106 = vmatpush1.xpose.msra.mxu0 0.0
    %107 = vmatprep.subr.mxu0 0.0
    %108 = vmatpush1.xpose.msra.mxu0 0.0
    %109 = vmatprep.subr.mxu0 0.0
    %110 = vmatpush1.xpose.msra.mxu0 0.0
    %111 = vmatprep.subr.mxu0 0.0
    %112 = vmatpush1.xpose.msra.mxu0 0.0
    %113 = vmatprep.subr.mxu0 0.0
    %114 = vmatpush1.xpose.msra.mxu0 0.0
    %115 = vmatprep.subr.mxu0 0.0
    %116 = vmatpush1.xpose.msra.mxu0 0.0
    %117 = vmatprep.subr.mxu0 0.0
    %118 = vmatpush1.xpose.msra.mxu0 0.0
    %119 = vmatprep.subr.mxu0 0.0
    %120 = vmatpush1.xpose.msra.mxu0 0.0
    %121 = vmatprep.subr.mxu0 0.0
    %122 = vmatpush1.xpose.msra.mxu0 0.0
    %123 = vmatprep.subr.mxu0 0.0
    %124 = vmatpush1.xpose.msra.mxu0 0.0
    %125 = vmatprep.subr.mxu0 0.0
    %126 = vmatpush1.xpose.msra.mxu0 0.0
    %127 = vmatprep.subr.mxu0 0.0
    %128 = vmatpush1.xpose.msra.mxu0 0.0
    %129 = vmatprep.subr.mxu0 0.0
    %130 = vmatpush1.xpose.msra.mxu0 0.0
    %131 = vmatprep.subr.mxu0 0.0
    %132 = vmatpush1.xpose.msra.mxu0 0.0
    %133 = vmatprep.subr.mxu0 0.0
    %134 = vmatpush1.xpose.msra.mxu0 0.0
    %135 = vmatprep.mubr.f32.mxu0 0.0
    %136 = vmatmul.mubr.f32.gmra.mrb[0].mxu0 %v60
    %v137 = vpop.f32.mrb[0].mxu0
    %v138 = vadd.f32 0.0, %v137
    %v139 = vpop.f32.mrb[0].mxu0
    %140 = vmatprep.mubr.f32.mxu0 0.0
    %141 = vmatmul.mubr.f32.gmra.mrb[0].mxu0 %v63
    %v142 = vpop.f32.mrb[0].mxu0
    %v143 = vadd.f32 0.0, %v142
    %v144 = vpop.f32.mrb[0].mxu0
    %145 = vdwg.mxu0
    %v146 = vlaneseq
    %v147 = vand.u32 %v146, 127
    %vm148 = vcmp.eq.s32.totalorder %v36, %v147
    %vm149 = vcmp.eq.s32.totalorder %v37, %v147
    %v150 = vsel %vm148, 1.0, %v138
    %v151 = vsel %vm149, 1.0, %v143
    %vm152 = vcmp.gt.f32.partialorder %v150, 0.0
    %vm153 = vcmp.gt.f32.partialorder %v151, 0.0
    %vm154 = vcmask 130048
    %v155 = vsel %vm154, %v150, 0.0
    %156 = vadd.xlane.f32.xlu0 %v155
    %v157 = vpop.xlane.xlu0 %156
    %v158 = vsel %vm154, %v151, 0.0
    %159 = vadd.xlane.f32.xlu0 %v158
    %v160 = vpop.xlane.xlu0 %159
    %v161 = vmax.f32 %v157, 1.0
    %v162 = vmax.f32 %v160, 1.0
    %v163 = vrsqrt.pop %v161
    %v164 = vrsqrt.pop %v162
    %v165 = vld [vmem:[#allocation2] sm:$0xf]
    %v166 = vld [vmem:[#allocation2 + $0x4] sm:$0xf]
    %v167 = vld [vmem:[#allocation2 + $0x8] sm:$0xf]
    %v168 = vld [vmem:[#allocation2 + $0xc] sm:$0xf]
    %v169 = vld [vmem:[#allocation2 + $0x10] sm:$0xf]
    %v170 = vld [vmem:[#allocation2 + $0x14] sm:$0xf]
    %v171 = vld [vmem:[#allocation2 + $0x18] sm:$0xf]
    %v172 = vld [vmem:[#allocation2 + $0x1c] sm:$0xf]
    %v173 = vld [vmem:[#allocation2 + $0x20] sm:$0xf]
    %v174 = vld [vmem:[#allocation2 + $0x24] sm:$0xf]
    %v175 = vld [vmem:[#allocation2 + $0x28] sm:$0xf]
    %v176 = vld [vmem:[#allocation2 + $0x2c] sm:$0xf]
    %v177 = vld [vmem:[#allocation2 + $0x30] sm:$0xf]
    %v178 = vld [vmem:[#allocation2 + $0x34] sm:$0xf]
    %v179 = vld [vmem:[#allocation2 + $0x38] sm:$0xf]
    %v180 = vld [vmem:[#allocation2 + $0x3c] sm:$0xf]
    %v181 = vld [vmem:[#allocation2 + $0x40] sm:$0xf]
    %v182 = vld [vmem:[#allocation2 + $0x44] sm:$0xf]
    %v183 = vld [vmem:[#allocation2 + $0x48] sm:$0xf]
    %v184 = vld [vmem:[#allocation2 + $0x4c] sm:$0xf]
    %v185 = vld [vmem:[#allocation2 + $0x50] sm:$0xf]
    %v186 = vld [vmem:[#allocation2 + $0x54] sm:$0xf]
    %v187 = vld [vmem:[#allocation2 + $0x58] sm:$0xf]
    %v188 = vld [vmem:[#allocation2 + $0x5c] sm:$0xf]
    %v189 = vld [vmem:[#allocation2 + $0x60] sm:$0xf]
    %v190 = vld [vmem:[#allocation2 + $0x64] sm:$0xf]
    %v191 = vld [vmem:[#allocation2 + $0x68] sm:$0xf]
    %v192 = vld [vmem:[#allocation2 + $0x6c] sm:$0xf]
    %v193 = vld [vmem:[#allocation2 + $0x70] sm:$0xf]
    %v194 = vld [vmem:[#allocation2 + $0x74] sm:$0xf]
    %v195 = vld [vmem:[%s3] sm:$0x1]
    %v196 = vld [vmem:[%s3 + $0x1] sm:$0x1]
    %v197 = vld [vmem:[%s3 + $0x2] sm:$0x1]
    %v198 = vld [vmem:[%s3 + $0x3] sm:$0x1]
    %v199 = vpack.c.bf16 %v33, %v32
    %v202 = vunpack.c.l.b16 %v193
    %v203 = vunpack.c.l.b16 %v194
    %v204 = vpack.c.b16 %v203, %v202
    %v207 = vsel %vm154, %v199, 0
    %209 = vmatprep.subr.bf16.mxu0 0
    %210 = vmatpush1.bf16.msra.mxu0 %v204
    %211 = vmatprep.subr.bf16.mxu0 0
    %212 = vmatpush1.bf16.msra.mxu0 0
    %213 = vmatprep.subr.bf16.mxu0 0
    %214 = vmatpush1.bf16.msra.mxu0 0
    %215 = vmatprep.subr.bf16.mxu0 0
    %216 = vmatpush1.bf16.msra.mxu0 0
    %217 = vmatprep.subr.bf16.mxu0 0
    %218 = vmatpush1.bf16.msra.mxu0 0
    %219 = vmatprep.subr.bf16.mxu0 0
    %220 = vmatpush1.bf16.msra.mxu0 0
    %221 = vmatprep.subr.bf16.mxu0 0
    %222 = vmatpush1.bf16.msra.mxu0 0
    %223 = vmatprep.subr.bf16.mxu0 0
    %224 = vmatpush1.bf16.msra.mxu0 0
    %225 = vmatprep.subr.bf16.mxu0 0
    %226 = vmatpush1.bf16.msra.mxu0 0
    %227 = vmatprep.subr.bf16.mxu0 0
    %228 = vmatpush1.bf16.msra.mxu0 0
    %229 = vmatprep.subr.bf16.mxu0 0
    %230 = vmatpush1.bf16.msra.mxu0 0
    %231 = vmatprep.subr.bf16.mxu0 0
    %232 = vmatpush1.bf16.msra.mxu0 0
    %233 = vmatprep.subr.bf16.mxu0 0
    %234 = vmatpush1.bf16.msra.mxu0 0
    %235 = vmatprep.subr.bf16.mxu0 0
    %236 = vmatpush1.bf16.msra.mxu0 0
    %237 = vmatprep.subr.bf16.mxu0 0
    %238 = vmatpush1.bf16.msra.mxu0 0
    %239 = vmatprep.subr.bf16.mxu0 0
    %240 = vmatpush1.bf16.msra.mxu0 0
    %241 = vmatprep.mubr.bf16.mxu0 0
    %242 = vmatmul.mubr.bf16.gmra.mrb[0].mxu0 %v207
    %v243 = vpop.f32.mrb[0].mxu0
    %v244 = vadd.f32 0.0, %v243
    %v245 = vpop.f32.mrb[0].mxu0
    %v246 = vpop.f32.mrb[0].mxu0
    %v247 = vadd.f32 0.0, %v246
    %v248 = vpop.f32.mrb[0].mxu0
    %249 = vdwg.mxu0
    %v250 = vmul.f32 %v163, %v244
    %v251 = vmul.f32 %v164, %v247
    %v253 = vsel %vm154, %v150, 0
    %v256 = vsel %vm154, %v151, 0
    %258 = vmatprep.subr.mxu0 0.0
    %259 = vmatpush1.msra.mxu0 %v250
    %260 = vmatprep.subr.mxu0 0.0
    %261 = vmatpush1.msra.mxu0 %v251
    %262 = vmatprep.subr.mxu0 0.0
    %263 = vmatpush1.msra.mxu0 0.0
    %264 = vmatprep.subr.mxu0 0.0
    %265 = vmatpush1.msra.mxu0 0.0
    %266 = vmatprep.subr.mxu0 0.0
    %267 = vmatpush1.msra.mxu0 0.0
    %268 = vmatprep.subr.mxu0 0.0
    %269 = vmatpush1.msra.mxu0 0.0
    %270 = vmatprep.subr.mxu0 0.0
    %271 = vmatpush1.msra.mxu0 0.0
    %272 = vmatprep.subr.mxu0 0.0
    %273 = vmatpush1.msra.mxu0 0.0
    %274 = vmatprep.subr.mxu0 0.0
    %275 = vmatpush1.msra.mxu0 0.0
    %276 = vmatprep.subr.mxu0 0.0
    %277 = vmatpush1.msra.mxu0 0.0
    %278 = vmatprep.subr.mxu0 0.0
    %279 = vmatpush1.msra.mxu0 0.0
    %280 = vmatprep.subr.mxu0 0.0
    %281 = vmatpush1.msra.mxu0 0.0
    %282 = vmatprep.subr.mxu0 0.0
    %283 = vmatpush1.msra.mxu0 0.0
    %284 = vmatprep.subr.mxu0 0.0
    %285 = vmatpush1.msra.mxu0 0.0
    %286 = vmatprep.subr.mxu0 0.0
    %287 = vmatpush1.msra.mxu0 0.0
    %288 = vmatprep.subr.mxu0 0.0
    %289 = vmatpush1.msra.mxu0 0.0
    %290 = vmatprep.subr.mxu0 0.0
    %291 = vmatpush1.msra.mxu0 0.0
    %292 = vmatprep.subr.mxu0 0.0
    %293 = vmatpush1.msra.mxu0 0.0
    %294 = vmatprep.subr.mxu0 0.0
    %295 = vmatpush1.msra.mxu0 0.0
    %296 = vmatprep.subr.mxu0 0.0
    %297 = vmatpush1.msra.mxu0 0.0
    %298 = vmatprep.subr.mxu0 0.0
    %299 = vmatpush1.msra.mxu0 0.0
    %300 = vmatprep.subr.mxu0 0.0
    %301 = vmatpush1.msra.mxu0 0.0
    %302 = vmatprep.subr.mxu0 0.0
    %303 = vmatpush1.msra.mxu0 0.0
    %304 = vmatprep.subr.mxu0 0.0
    %305 = vmatpush1.msra.mxu0 0.0
    %306 = vmatprep.subr.mxu0 0.0
    %307 = vmatpush1.msra.mxu0 0.0
    %308 = vmatprep.subr.mxu0 0.0
    %309 = vmatpush1.msra.mxu0 0.0
    %310 = vmatprep.subr.mxu0 0.0
    %311 = vmatpush1.msra.mxu0 0.0
    %312 = vmatprep.subr.mxu0 0.0
    %313 = vmatpush1.msra.mxu0 0.0
    %314 = vmatprep.subr.mxu0 0.0
    %315 = vmatpush1.msra.mxu0 0.0
    %316 = vmatprep.subr.mxu0 0.0
    %317 = vmatpush1.msra.mxu0 0.0
    %318 = vmatprep.subr.mxu0 0.0
    %319 = vmatpush1.msra.mxu0 0.0
    %320 = vmatprep.subr.mxu0 0.0
    %321 = vmatpush1.msra.mxu0 0.0
    %322 = vmatprep.mubr.f32.mxu0 0.0
    %323 = vmatmul.mubr.f32.gmra.mrb[0].mxu0 %v253
    %v324 = vpop.f32.mrb[0].mxu0
    %v325 = vadd.f32 0.0, %v324
    %v326 = vpop.f32.mrb[0].mxu0
    %327 = vmatprep.mubr.f32.mxu0 0.0
    %328 = vmatmul.mubr.f32.gmra.mrb[0].mxu0 %v256
    %v329 = vpop.f32.mrb[0].mxu0
    %v330 = vadd.f32 0.0, %v329
    %v331 = vpop.f32.mrb[0].mxu0
    %332 = vdwg.mxu0
    %v333 = vmul.f32 %v163, %v325
    %v334 = vmul.f32 %v164, %v330
    %v335 = vlaneseq
    %v336 = vshrl.u32 %v335, 7
    %v337 = vsub.s32 0, %v336
    %v338 = vrot.slane %v195, %v337
    %v339 = vadd.f32 %v333, %v338
    %v340 = vadd.f32 %v334, %v338
    %v341 = vmax.f32 %v339, 0.0
    %v342 = vmax.f32 %v340, 0.0
    %v343 = vpack.c.bf16 %v342, %v341
    %v348 = vunpack.c.l.b16 %v165
    %v349 = vunpack.c.l.b16 %v166
    %v350 = vunpack.c.l.b16 %v167
    %v351 = vunpack.c.l.b16 %v168
    %v352 = vpack.c.b16 %v349, %v348
    %v353 = vpack.c.b16 %v351, %v350
    %vm356 = vcmask 261120
    %v358 = vsel %vm356, %v343, 0
    %360 = vmatprep.subr.bf16.mxu0 0
    %361 = vmatpush1.bf16.msra.mxu0 %v352
    %362 = vmatprep.subr.bf16.mxu0 0
    %363 = vmatpush1.bf16.msra.mxu0 %v353
    %364 = vmatprep.subr.bf16.mxu0 0
    %365 = vmatpush1.bf16.msra.mxu0 0
    %366 = vmatprep.subr.bf16.mxu0 0
    %367 = vmatpush1.bf16.msra.mxu0 0
    %368 = vmatprep.subr.bf16.mxu0 0
    %369 = vmatpush1.bf16.msra.mxu0 0
    %370 = vmatprep.subr.bf16.mxu0 0
    %371 = vmatpush1.bf16.msra.mxu0 0
    %372 = vmatprep.subr.bf16.mxu0 0
    %373 = vmatpush1.bf16.msra.mxu0 0
    %374 = vmatprep.subr.bf16.mxu0 0
    %375 = vmatpush1.bf16.msra.mxu0 0
    %376 = vmatprep.subr.bf16.mxu0 0
    %377 = vmatpush1.bf16.msra.mxu0 0
    %378 = vmatprep.subr.bf16.mxu0 0
    %379 = vmatpush1.bf16.msra.mxu0 0
    %380 = vmatprep.subr.bf16.mxu0 0
    %381 = vmatpush1.bf16.msra.mxu0 0
    %382 = vmatprep.subr.bf16.mxu0 0
    %383 = vmatpush1.bf16.msra.mxu0 0
    %384 = vmatprep.subr.bf16.mxu0 0
    %385 = vmatpush1.bf16.msra.mxu0 0
    %386 = vmatprep.subr.bf16.mxu0 0
    %387 = vmatpush1.bf16.msra.mxu0 0
    %388 = vmatprep.subr.bf16.mxu0 0
    %389 = vmatpush1.bf16.msra.mxu0 0
    %390 = vmatprep.subr.bf16.mxu0 0
    %391 = vmatpush1.bf16.msra.mxu0 0
    %392 = vmatprep.mubr.bf16.mxu0 0
    %393 = vmatmul.mubr.bf16.gmra.mrb[0].mxu0 %v358
    %v394 = vpop.f32.mrb[0].mxu0
    %v395 = vadd.f32 0.0, %v394
    %v396 = vpop.f32.mrb[0].mxu0
    %v397 = vpop.f32.mrb[0].mxu0
    %v398 = vadd.f32 0.0, %v397
    %v399 = vpop.f32.mrb[0].mxu0
    %400 = vdwg.mxu0
    %403 = vrot.lane.b32.xlu0 %v395, 64
    %v404 = vpop.permute.xlu0 %403
    %405 = vrot.lane.b32.xlu0 %v398, 64
    %v406 = vpop.permute.xlu0 %405
    %409 = vxpose.xlu0.b32.start [1/16] %v404, 128
    %410 = vxpose.xlu0.b32.cont [2/16] %v406, 128
    %411 = vxpose.xlu0.b32.cont [3/16] 0.0, 128
    %412 = vxpose.xlu0.b32.cont [4/16] 0.0, 128
    %413 = vxpose.xlu0.b32.cont [5/16] 0.0, 128
    %414 = vxpose.xlu0.b32.cont [6/16] 0.0, 128
    %415 = vxpose.xlu0.b32.cont [7/16] 0.0, 128
    %416 = vxpose.xlu0.b32.cont [8/16] 0.0, 128
    %417 = vxpose.xlu0.b32.cont [9/16] 0.0, 128
    %418 = vxpose.xlu0.b32.cont [10/16] 0.0, 128
    %419 = vxpose.xlu0.b32.cont [11/16] 0.0, 128
    %420 = vxpose.xlu0.b32.cont [12/16] 0.0, 128
    %421 = vxpose.xlu0.b32.cont [13/16] 0.0, 128
    %422 = vxpose.xlu0.b32.cont [14/16] 0.0, 128
    %423 = vxpose.xlu0.b32.cont [15/16] 0.0, 128
    %424 = vxpose.xlu0.b32.end [16/16] 0.0, 128
    %v425 = vpop.trf.xlu0
    %v426 = vpop.trf.xlu0
    %v427 = vpop.trf.xlu0
    %v428 = vpop.trf.xlu0
    %v429 = vpop.trf.xlu0
    %v430 = vpop.trf.xlu0
    %v431 = vpop.trf.xlu0
    %v432 = vpop.trf.xlu0
    %v433 = vpop.trf.xlu0
    %v434 = vpop.trf.xlu0
    %v435 = vpop.trf.xlu0
    %v436 = vpop.trf.xlu0
    %v437 = vpop.trf.xlu0
    %v438 = vpop.trf.xlu0
    %v439 = vpop.trf.xlu0
    %v440 = vpop.trf.xlu0
    %441 = vset.pattern.permute.xlu0 65
    %442 = vperm.xlu0 %441, %v395
    %v443 = vpop.permute.xlu0 %442
    %445 = vset.pattern.permute.xlu0 65
    %446 = vperm.xlu0 %445, %v398
    %v447 = vpop.permute.xlu0 %446
    %v449 = vlaneseq
    %v450 = vshrl.u32 %v449, 7
    %v451 = vsub.s32 0, %v450
    %v452 = vrot.slane %v425, %v451
    %v453 = vadd.f32 %v443, %v452
    %v454 = vadd.f32 %v447, %v452
    %vm455 = vcmp.gt.f32.partialorder %v453, 0.0
    %vm456 = vcmp.gt.f32.partialorder %v454, 0.0
    %v457 = vmul.f32 %v453, 0.2
    %v458 = vmul.f32 %v454, 0.2
    %v459 = vsel %vm455, %v453, %v457
    %v460 = vsel %vm456, %v454, %v458
    %v461 = vsel %vm152, %v459, -1e+30
    %v462 = vsel %vm153, %v460, -1e+30
    %v463 = vsel %vm154, %v461, -inf
    %464 = vmax.xlane.f32.xlu0 %v463
    %v465 = vpop.xlane.xlu0 %464
    %v466 = vsel %vm154, %v462, -inf
    %467 = vmax.xlane.f32.xlu0 %v466
    %v468 = vpop.xlane.xlu0 %467
    %v469 = vsub.f32 %v461, %v465
    %v470 = vsub.f32 %v462, %v468
    %v471 = vmul.f32 %v469, 1.442695
    %v472 = vpow.pop %v471
    %v473 = vmul.f32 %v470, 1.442695
    %v474 = vpow.pop %v473
    %v475 = vmul.f32 %v150, %v472
    %v476 = vmul.f32 %v151, %v474
    %v477 = vsel %vm154, %v475, 0.0
    %478 = vadd.xlane.f32.xlu0 %v477
    %v479 = vpop.xlane.xlu0 %478
    %v480 = vsel %vm154, %v476, 0.0
    %481 = vadd.xlane.f32.xlu0 %v480
    %v482 = vpop.xlane.xlu0 %481
    %v483 = vrcp.pop %v479
    %v484 = vrcp.pop %v482
    %v485 = vmul.f32 %v475, %v483
    %v486 = vmul.f32 %v476, %v484
    %v487 = vlaneseq
    %v488 = vshrl.u32 %v487, 7
    %v489 = vsub.s32 0, %v488
    %v490 = vrot.slane %v196, %v489
    %v492 = vsel %vm154, %v485, 0
    %v495 = vsel %vm154, %v486, 0
    %497 = vmatprep.subr.mxu0 0.0
    %498 = vmatpush1.msra.mxu0 %v395
    %499 = vmatprep.subr.mxu0 0.0
    %500 = vmatpush1.msra.mxu0 %v398
    %501 = vmatprep.subr.mxu0 0.0
    %502 = vmatpush1.msra.mxu0 0.0
    %503 = vmatprep.subr.mxu0 0.0
    %504 = vmatpush1.msra.mxu0 0.0
    %505 = vmatprep.subr.mxu0 0.0
    %506 = vmatpush1.msra.mxu0 0.0
    %507 = vmatprep.subr.mxu0 0.0
    %508 = vmatpush1.msra.mxu0 0.0
    %509 = vmatprep.subr.mxu0 0.0
    %510 = vmatpush1.msra.mxu0 0.0
    %511 = vmatprep.subr.mxu0 0.0
    %512 = vmatpush1.msra.mxu0 0.0
    %513 = vmatprep.subr.mxu0 0.0
    %514 = vmatpush1.msra.mxu0 0.0
    %515 = vmatprep.subr.mxu0 0.0
    %516 = vmatpush1.msra.mxu0 0.0
    %517 = vmatprep.subr.mxu0 0.0
    %518 = vmatpush1.msra.mxu0 0.0
    %519 = vmatprep.subr.mxu0 0.0
    %520 = vmatpush1.msra.mxu0 0.0
    %521 = vmatprep.subr.mxu0 0.0
    %522 = vmatpush1.msra.mxu0 0.0
    %523 = vmatprep.subr.mxu0 0.0
    %524 = vmatpush1.msra.mxu0 0.0
    %525 = vmatprep.subr.mxu0 0.0
    %526 = vmatpush1.msra.mxu0 0.0
    %527 = vmatprep.subr.mxu0 0.0
    %528 = vmatpush1.msra.mxu0 0.0
    %529 = vmatprep.subr.mxu0 0.0
    %530 = vmatpush1.msra.mxu0 0.0
    %531 = vmatprep.subr.mxu0 0.0
    %532 = vmatpush1.msra.mxu0 0.0
    %533 = vmatprep.subr.mxu0 0.0
    %534 = vmatpush1.msra.mxu0 0.0
    %535 = vmatprep.subr.mxu0 0.0
    %536 = vmatpush1.msra.mxu0 0.0
    %537 = vmatprep.subr.mxu0 0.0
    %538 = vmatpush1.msra.mxu0 0.0
    %539 = vmatprep.subr.mxu0 0.0
    %540 = vmatpush1.msra.mxu0 0.0
    %541 = vmatprep.subr.mxu0 0.0
    %542 = vmatpush1.msra.mxu0 0.0
    %543 = vmatprep.subr.mxu0 0.0
    %544 = vmatpush1.msra.mxu0 0.0
    %545 = vmatprep.subr.mxu0 0.0
    %546 = vmatpush1.msra.mxu0 0.0
    %547 = vmatprep.subr.mxu0 0.0
    %548 = vmatpush1.msra.mxu0 0.0
    %549 = vmatprep.subr.mxu0 0.0
    %550 = vmatpush1.msra.mxu0 0.0
    %551 = vmatprep.subr.mxu0 0.0
    %552 = vmatpush1.msra.mxu0 0.0
    %553 = vmatprep.subr.mxu0 0.0
    %554 = vmatpush1.msra.mxu0 0.0
    %555 = vmatprep.subr.mxu0 0.0
    %556 = vmatpush1.msra.mxu0 0.0
    %557 = vmatprep.subr.mxu0 0.0
    %558 = vmatpush1.msra.mxu0 0.0
    %559 = vmatprep.subr.mxu0 0.0
    %560 = vmatpush1.msra.mxu0 0.0
    %561 = vmatprep.mubr.f32.mxu0 0.0
    %562 = vmatmul.mubr.f32.gmra.mrb[0].mxu0 %v492
    %v563 = vpop.f32.mrb[0].mxu0
    %v564 = vadd.f32 %v490, %v563
    %v565 = vpop.f32.mrb[0].mxu0
    %566 = vmatprep.mubr.f32.mxu0 0.0
    %567 = vmatmul.mubr.f32.gmra.mrb[0].mxu0 %v495
    %v568 = vpop.f32.mrb[0].mxu0
    %v569 = vadd.f32 %v490, %v568
    %v570 = vpop.f32.mrb[0].mxu0
    %571 = vdwg.mxu0
    %v572 = vmax.f32 %v564, 0.0
    %v573 = vmax.f32 %v569, 0.0
    %v574 = vpack.c.bf16 %v573, %v572
    %v583 = vunpack.c.l.b16 %v169
    %v584 = vunpack.c.l.b16 %v170
    %v585 = vunpack.c.l.b16 %v171
    %v586 = vunpack.c.l.b16 %v172
    %v587 = vunpack.c.l.b16 %v173
    %v588 = vunpack.c.l.b16 %v174
    %v589 = vunpack.c.l.b16 %v175
    %v590 = vunpack.c.l.b16 %v176
    %v591 = vpack.c.b16 %v584, %v583
    %v592 = vpack.c.b16 %v586, %v585
    %v593 = vpack.c.b16 %v588, %v587
    %v594 = vpack.c.b16 %v590, %v589
    %vm599 = vcmask 523264
    %v601 = vsel %vm599, %v574, 0
    %603 = vmatprep.subr.bf16.mxu0 0
    %604 = vmatpush1.bf16.msra.mxu0 %v591
    %605 = vmatprep.subr.bf16.mxu0 0
    %606 = vmatpush1.bf16.msra.mxu0 %v592
    %607 = vmatprep.subr.bf16.mxu0 0
    %608 = vmatpush1.bf16.msra.mxu0 %v593
    %609 = vmatprep.subr.bf16.mxu0 0
    %610 = vmatpush1.bf16.msra.mxu0 %v594
    %611 = vmatprep.subr.bf16.mxu0 0
    %612 = vmatpush1.bf16.msra.mxu0 0
    %613 = vmatprep.subr.bf16.mxu0 0
    %614 = vmatpush1.bf16.msra.mxu0 0
    %615 = vmatprep.subr.bf16.mxu0 0
    %616 = vmatpush1.bf16.msra.mxu0 0
    %617 = vmatprep.subr.bf16.mxu0 0
    %618 = vmatpush1.bf16.msra.mxu0 0
    %619 = vmatprep.subr.bf16.mxu0 0
    %620 = vmatpush1.bf16.msra.mxu0 0
    %621 = vmatprep.subr.bf16.mxu0 0
    %622 = vmatpush1.bf16.msra.mxu0 0
    %623 = vmatprep.subr.bf16.mxu0 0
    %624 = vmatpush1.bf16.msra.mxu0 0
    %625 = vmatprep.subr.bf16.mxu0 0
    %626 = vmatpush1.bf16.msra.mxu0 0
    %627 = vmatprep.subr.bf16.mxu0 0
    %628 = vmatpush1.bf16.msra.mxu0 0
    %629 = vmatprep.subr.bf16.mxu0 0
    %630 = vmatpush1.bf16.msra.mxu0 0
    %631 = vmatprep.subr.bf16.mxu0 0
    %632 = vmatpush1.bf16.msra.mxu0 0
    %633 = vmatprep.subr.bf16.mxu0 0
    %634 = vmatpush1.bf16.msra.mxu0 0
    %635 = vmatprep.mubr.bf16.mxu0 0
    %636 = vmatmul.mubr.bf16.gmra.mrb[0].mxu0 %v601
    %v637 = vpop.f32.mrb[0].mxu0
    %v638 = vadd.f32 0.0, %v637
    %v639 = vpop.f32.mrb[0].mxu0
    %v640 = vpop.f32.mrb[0].mxu0
    %v641 = vadd.f32 0.0, %v640
    %v642 = vpop.f32.mrb[0].mxu0
    %643 = vdwg.mxu0
    %v644 = vmul.f32 %v163, %v638
    %v645 = vmul.f32 %v164, %v641
    %646 = vmatprep.subr.mxu0 0.0
    %647 = vmatpush1.msra.mxu0 %v644
    %648 = vmatprep.subr.mxu0 0.0
    %649 = vmatpush1.msra.mxu0 %v645
    %650 = vmatprep.subr.mxu0 0.0
    %651 = vmatpush1.msra.mxu0 0.0
    %652 = vmatprep.subr.mxu0 0.0
    %653 = vmatpush1.msra.mxu0 0.0
    %654 = vmatprep.subr.mxu0 0.0
    %655 = vmatpush1.msra.mxu0 0.0
    %656 = vmatprep.subr.mxu0 0.0
    %657 = vmatpush1.msra.mxu0 0.0
    %658 = vmatprep.subr.mxu0 0.0
    %659 = vmatpush1.msra.mxu0 0.0
    %660 = vmatprep.subr.mxu0 0.0
    %661 = vmatpush1.msra.mxu0 0.0
    %662 = vmatprep.subr.mxu0 0.0
    %663 = vmatpush1.msra.mxu0 0.0
    %664 = vmatprep.subr.mxu0 0.0
    %665 = vmatpush1.msra.mxu0 0.0
    %666 = vmatprep.subr.mxu0 0.0
    %667 = vmatpush1.msra.mxu0 0.0
    %668 = vmatprep.subr.mxu0 0.0
    %669 = vmatpush1.msra.mxu0 0.0
    %670 = vmatprep.subr.mxu0 0.0
    %671 = vmatpush1.msra.mxu0 0.0
    %672 = vmatprep.subr.mxu0 0.0
    %673 = vmatpush1.msra.mxu0 0.0
    %674 = vmatprep.subr.mxu0 0.0
    %675 = vmatpush1.msra.mxu0 0.0
    %676 = vmatprep.subr.mxu0 0.0
    %677 = vmatpush1.msra.mxu0 0.0
    %678 = vmatprep.subr.mxu0 0.0
    %679 = vmatpush1.msra.mxu0 0.0
    %680 = vmatprep.subr.mxu0 0.0
    %681 = vmatpush1.msra.mxu0 0.0
    %682 = vmatprep.subr.mxu0 0.0
    %683 = vmatpush1.msra.mxu0 0.0
    %684 = vmatprep.subr.mxu0 0.0
    %685 = vmatpush1.msra.mxu0 0.0
    %686 = vmatprep.subr.mxu0 0.0
    %687 = vmatpush1.msra.mxu0 0.0
    %688 = vmatprep.subr.mxu0 0.0
    %689 = vmatpush1.msra.mxu0 0.0
    %690 = vmatprep.subr.mxu0 0.0
    %691 = vmatpush1.msra.mxu0 0.0
    %692 = vmatprep.subr.mxu0 0.0
    %693 = vmatpush1.msra.mxu0 0.0
    %694 = vmatprep.subr.mxu0 0.0
    %695 = vmatpush1.msra.mxu0 0.0
    %696 = vmatprep.subr.mxu0 0.0
    %697 = vmatpush1.msra.mxu0 0.0
    %698 = vmatprep.subr.mxu0 0.0
    %699 = vmatpush1.msra.mxu0 0.0
    %700 = vmatprep.subr.mxu0 0.0
    %701 = vmatpush1.msra.mxu0 0.0
    %702 = vmatprep.subr.mxu0 0.0
    %703 = vmatpush1.msra.mxu0 0.0
    %704 = vmatprep.subr.mxu0 0.0
    %705 = vmatpush1.msra.mxu0 0.0
    %706 = vmatprep.subr.mxu0 0.0
    %707 = vmatpush1.msra.mxu0 0.0
    %708 = vmatprep.subr.mxu0 0.0
    %709 = vmatpush1.msra.mxu0 0.0
    %710 = vmatprep.mubr.f32.mxu0 0.0
    %711 = vmatmul.mubr.f32.gmra.mrb[0].mxu0 %v253
    %v712 = vpop.f32.mrb[0].mxu0
    %v713 = vadd.f32 0.0, %v712
    %v714 = vpop.f32.mrb[0].mxu0
    %715 = vmatprep.mubr.f32.mxu0 0.0
    %716 = vmatmul.mubr.f32.gmra.mrb[0].mxu0 %v256
    %v717 = vpop.f32.mrb[0].mxu0
    %v718 = vadd.f32 0.0, %v717
    %v719 = vpop.f32.mrb[0].mxu0
    %720 = vdwg.mxu0
    %v721 = vmul.f32 %v163, %v713
    %v722 = vmul.f32 %v164, %v718
    %v723 = vlaneseq
    %v724 = vshrl.u32 %v723, 7
    %v725 = vsub.s32 0, %v724
    %v726 = vrot.slane %v197, %v725
    %v727 = vadd.f32 %v721, %v726
    %v728 = vadd.f32 %v722, %v726
    %v729 = vmax.f32 %v727, 0.0
    %v730 = vmax.f32 %v728, 0.0
    %v731 = vpack.c.bf16 %v730, %v729
    %v748 = vunpack.c.l.b16 %v177
    %v749 = vunpack.c.l.b16 %v178
    %v750 = vunpack.c.l.b16 %v179
    %v751 = vunpack.c.l.b16 %v180
    %v752 = vunpack.c.l.b16 %v181
    %v753 = vunpack.c.l.b16 %v182
    %v754 = vunpack.c.l.b16 %v183
    %v755 = vunpack.c.l.b16 %v184
    %v756 = vunpack.c.l.b16 %v185
    %v757 = vunpack.c.l.b16 %v186
    %v758 = vunpack.c.l.b16 %v187
    %v759 = vunpack.c.l.b16 %v188
    %v760 = vunpack.c.l.b16 %v189
    %v761 = vunpack.c.l.b16 %v190
    %v762 = vunpack.c.l.b16 %v191
    %v763 = vunpack.c.l.b16 %v192
    %v764 = vpack.c.b16 %v749, %v748
    %v765 = vpack.c.b16 %v751, %v750
    %v766 = vpack.c.b16 %v753, %v752
    %v767 = vpack.c.b16 %v755, %v754
    %v768 = vpack.c.b16 %v757, %v756
    %v769 = vpack.c.b16 %v759, %v758
    %v770 = vpack.c.b16 %v761, %v760
    %v771 = vpack.c.b16 %v763, %v762
    %780 = vmatprep.subr.bf16.mxu0 0
    %781 = vmatpush1.bf16.msra.mxu0 %v764
    %782 = vmatprep.subr.bf16.mxu0 0
    %783 = vmatpush1.bf16.msra.mxu0 %v765
    %784 = vmatprep.subr.bf16.mxu0 0
    %785 = vmatpush1.bf16.msra.mxu0 %v766
    %786 = vmatprep.subr.bf16.mxu0 0
    %787 = vmatpush1.bf16.msra.mxu0 %v767
    %788 = vmatprep.subr.bf16.mxu0 0
    %789 = vmatpush1.bf16.msra.mxu0 %v768
    %790 = vmatprep.subr.bf16.mxu0 0
    %791 = vmatpush1.bf16.msra.mxu0 %v769
    %792 = vmatprep.subr.bf16.mxu0 0
    %793 = vmatpush1.bf16.msra.mxu0 %v770
    %794 = vmatprep.subr.bf16.mxu0 0
    %795 = vmatpush1.bf16.msra.mxu0 %v771
    %796 = vmatprep.subr.bf16.mxu0 0
    %797 = vmatpush1.bf16.msra.mxu0 0
    %798 = vmatprep.subr.bf16.mxu0 0
    %799 = vmatpush1.bf16.msra.mxu0 0
    %800 = vmatprep.subr.bf16.mxu0 0
    %801 = vmatpush1.bf16.msra.mxu0 0
    %802 = vmatprep.subr.bf16.mxu0 0
    %803 = vmatpush1.bf16.msra.mxu0 0
    %804 = vmatprep.subr.bf16.mxu0 0
    %805 = vmatpush1.bf16.msra.mxu0 0
    %806 = vmatprep.subr.bf16.mxu0 0
    %807 = vmatpush1.bf16.msra.mxu0 0
    %808 = vmatprep.subr.bf16.mxu0 0
    %809 = vmatpush1.bf16.msra.mxu0 0
    %810 = vmatprep.subr.bf16.mxu0 0
    %811 = vmatpush1.bf16.msra.mxu0 0
    %812 = vmatprep.mubr.bf16.mxu0 0
    %813 = vmatmul.mubr.bf16.gmra.mrb[0].mxu0 %v731
    %v814 = vpop.f32.mrb[0].mxu0
    %v815 = vadd.f32 0.0, %v814
    %v816 = vpop.f32.mrb[0].mxu0
    %v817 = vpop.f32.mrb[0].mxu0
    %v818 = vadd.f32 0.0, %v817
    %v819 = vpop.f32.mrb[0].mxu0
    %820 = vdwg.mxu0
    %823 = vrot.lane.b32.xlu0 %v815, 126
    %v824 = vpop.permute.xlu0 %823
    %825 = vrot.lane.b32.xlu0 %v818, 126
    %v826 = vpop.permute.xlu0 %825
    %829 = vxpose.xlu0.b32.start [1/16] %v824, 128
    %830 = vxpose.xlu0.b32.cont [2/16] %v826, 128
    %831 = vxpose.xlu0.b32.cont [3/16] 0.0, 128
    %832 = vxpose.xlu0.b32.cont [4/16] 0.0, 128
    %833 = vxpose.xlu0.b32.cont [5/16] 0.0, 128
    %834 = vxpose.xlu0.b32.cont [6/16] 0.0, 128
    %835 = vxpose.xlu0.b32.cont [7/16] 0.0, 128
    %836 = vxpose.xlu0.b32.cont [8/16] 0.0, 128
    %837 = vxpose.xlu0.b32.cont [9/16] 0.0, 128
    %838 = vxpose.xlu0.b32.cont [10/16] 0.0, 128
    %839 = vxpose.xlu0.b32.cont [11/16] 0.0, 128
    %840 = vxpose.xlu0.b32.cont [12/16] 0.0, 128
    %841 = vxpose.xlu0.b32.cont [13/16] 0.0, 128
    %842 = vxpose.xlu0.b32.cont [14/16] 0.0, 128
    %843 = vxpose.xlu0.b32.cont [15/16] 0.0, 128
    %844 = vxpose.xlu0.b32.end [16/16] 0.0, 128
    %v845 = vpop.trf.xlu0
    %v846 = vpop.trf.xlu0
    %v847 = vpop.trf.xlu0
    %v848 = vpop.trf.xlu0
    %v849 = vpop.trf.xlu0
    %v850 = vpop.trf.xlu0
    %v851 = vpop.trf.xlu0
    %v852 = vpop.trf.xlu0
    %v853 = vpop.trf.xlu0
    %v854 = vpop.trf.xlu0
    %v855 = vpop.trf.xlu0
    %v856 = vpop.trf.xlu0
    %v857 = vpop.trf.xlu0
    %v858 = vpop.trf.xlu0
    %v859 = vpop.trf.xlu0
    %v860 = vpop.trf.xlu0
    %861 = vset.pattern.permute.xlu0 3
    %862 = vperm.xlu0 %861, %v815
    %v863 = vpop.permute.xlu0 %862
    %865 = vset.pattern.permute.xlu0 3
    %866 = vperm.xlu0 %865, %v818
    %v867 = vpop.permute.xlu0 %866
    %v869 = vlaneseq
    %v870 = vshrl.u32 %v869, 7
    %v871 = vsub.s32 0, %v870
    %v872 = vrot.slane %v845, %v871
    %v873 = vadd.f32 %v863, %v872
    %v874 = vadd.f32 %v867, %v872
    %vm875 = vcmp.gt.f32.partialorder %v873, 0.0
    %vm876 = vcmp.gt.f32.partialorder %v874, 0.0
    %v877 = vmul.f32 %v873, 0.2
    %v878 = vmul.f32 %v874, 0.2
    %v879 = vsel %vm875, %v873, %v877
    %v880 = vsel %vm876, %v874, %v878
    %v881 = vsel %vm152, %v879, -1e+30
    %v882 = vsel %vm153, %v880, -1e+30
    %v883 = vsel %vm154, %v881, -inf
    %884 = vmax.xlane.f32.xlu0 %v883
    %v885 = vpop.xlane.xlu0 %884
    %v886 = vsel %vm154, %v882, -inf
    %887 = vmax.xlane.f32.xlu0 %v886
    %v888 = vpop.xlane.xlu0 %887
    %v889 = vsub.f32 %v881, %v885
    %v890 = vsub.f32 %v882, %v888
    %v891 = vmul.f32 %v889, 1.442695
    %v892 = vpow.pop %v891
    %v893 = vmul.f32 %v890, 1.442695
    %v894 = vpow.pop %v893
    %v895 = vmul.f32 %v150, %v892
    %v896 = vmul.f32 %v151, %v894
    %v897 = vsel %vm154, %v895, 0.0
    %898 = vadd.xlane.f32.xlu0 %v897
    %v899 = vpop.xlane.xlu0 %898
    %v900 = vsel %vm154, %v896, 0.0
    %901 = vadd.xlane.f32.xlu0 %v900
    %v902 = vpop.xlane.xlu0 %901
    %v903 = vrcp.pop %v899
    %v904 = vrcp.pop %v902
    %v905 = vmul.f32 %v895, %v903
    %v906 = vmul.f32 %v896, %v904
    %v907 = vlaneseq
    %v908 = vshrl.u32 %v907, 7
    %v909 = vsub.s32 0, %v908
    %v910 = vrot.slane %v198, %v909
    %v912 = vsel %vm154, %v905, 0
    %v915 = vsel %vm154, %v906, 0
    %917 = vmatprep.subr.mxu0 0.0
    %918 = vmatpush1.msra.mxu0 %v815
    %919 = vmatprep.subr.mxu0 0.0
    %920 = vmatpush1.msra.mxu0 %v818
    %921 = vmatprep.subr.mxu0 0.0
    %922 = vmatpush1.msra.mxu0 0.0
    %923 = vmatprep.subr.mxu0 0.0
    %924 = vmatpush1.msra.mxu0 0.0
    %925 = vmatprep.subr.mxu0 0.0
    %926 = vmatpush1.msra.mxu0 0.0
    %927 = vmatprep.subr.mxu0 0.0
    %928 = vmatpush1.msra.mxu0 0.0
    %929 = vmatprep.subr.mxu0 0.0
    %930 = vmatpush1.msra.mxu0 0.0
    %931 = vmatprep.subr.mxu0 0.0
    %932 = vmatpush1.msra.mxu0 0.0
    %933 = vmatprep.subr.mxu0 0.0
    %934 = vmatpush1.msra.mxu0 0.0
    %935 = vmatprep.subr.mxu0 0.0
    %936 = vmatpush1.msra.mxu0 0.0
    %937 = vmatprep.subr.mxu0 0.0
    %938 = vmatpush1.msra.mxu0 0.0
    %939 = vmatprep.subr.mxu0 0.0
    %940 = vmatpush1.msra.mxu0 0.0
    %941 = vmatprep.subr.mxu0 0.0
    %942 = vmatpush1.msra.mxu0 0.0
    %943 = vmatprep.subr.mxu0 0.0
    %944 = vmatpush1.msra.mxu0 0.0
    %945 = vmatprep.subr.mxu0 0.0
    %946 = vmatpush1.msra.mxu0 0.0
    %947 = vmatprep.subr.mxu0 0.0
    %948 = vmatpush1.msra.mxu0 0.0
    %949 = vmatprep.subr.mxu0 0.0
    %950 = vmatpush1.msra.mxu0 0.0
    %951 = vmatprep.subr.mxu0 0.0
    %952 = vmatpush1.msra.mxu0 0.0
    %953 = vmatprep.subr.mxu0 0.0
    %954 = vmatpush1.msra.mxu0 0.0
    %955 = vmatprep.subr.mxu0 0.0
    %956 = vmatpush1.msra.mxu0 0.0
    %957 = vmatprep.subr.mxu0 0.0
    %958 = vmatpush1.msra.mxu0 0.0
    %959 = vmatprep.subr.mxu0 0.0
    %960 = vmatpush1.msra.mxu0 0.0
    %961 = vmatprep.subr.mxu0 0.0
    %962 = vmatpush1.msra.mxu0 0.0
    %963 = vmatprep.subr.mxu0 0.0
    %964 = vmatpush1.msra.mxu0 0.0
    %965 = vmatprep.subr.mxu0 0.0
    %966 = vmatpush1.msra.mxu0 0.0
    %967 = vmatprep.subr.mxu0 0.0
    %968 = vmatpush1.msra.mxu0 0.0
    %969 = vmatprep.subr.mxu0 0.0
    %970 = vmatpush1.msra.mxu0 0.0
    %971 = vmatprep.subr.mxu0 0.0
    %972 = vmatpush1.msra.mxu0 0.0
    %973 = vmatprep.subr.mxu0 0.0
    %974 = vmatpush1.msra.mxu0 0.0
    %975 = vmatprep.subr.mxu0 0.0
    %976 = vmatpush1.msra.mxu0 0.0
    %977 = vmatprep.subr.mxu0 0.0
    %978 = vmatpush1.msra.mxu0 0.0
    %979 = vmatprep.subr.mxu0 0.0
    %980 = vmatpush1.msra.mxu0 0.0
    %981 = vmatprep.mubr.f32.mxu0 0.0
    %982 = vmatmul.mubr.f32.gmra.mrb[0].mxu0 %v912
    %v983 = vpop.f32.mrb[0].mxu0
    %v984 = vadd.f32 %v910, %v983
    %v985 = vpop.f32.mrb[0].mxu0
    %986 = vmatprep.mubr.f32.mxu0 0.0
    %987 = vmatmul.mubr.f32.gmra.mrb[0].mxu0 %v915
    %v988 = vpop.f32.mrb[0].mxu0
    %v989 = vadd.f32 %v910, %v988
    %v990 = vpop.f32.mrb[0].mxu0
    %991 = vdwg.mxu0
    %vm992 = vcmp.lt.s32.totalorder %v147, 2
    %v993 = vsel %vm992, %v984, -1e+30
    %v994 = vsel %vm992, %v989, -1e+30
    %995 = vmax.xlane.f32.xlu0 %v993
    %v996 = vpop.xlane.xlu0 %995
    %997 = vmax.xlane.f32.xlu0 %v994
    %v998 = vpop.xlane.xlu0 %997
    %v999 = vsub.f32 %v984, %v996
    %v1000 = vsub.f32 %v989, %v998
    %v1001 = vmul.f32 %v999, 1.442695
    %v1002 = vpow.pop %v1001
    %v1003 = vmul.f32 %v1000, 1.442695
    %v1004 = vpow.pop %v1003
    %v1005 = vsel %vm992, %v1002, 0.0
    %v1006 = vsel %vm992, %v1004, 0.0
    %1007 = vadd.xlane.f32.xlu0 %v1005
    %v1008 = vpop.xlane.xlu0 %1007
    %1009 = vadd.xlane.f32.xlu0 %v1006
    %v1010 = vpop.xlane.xlu0 %1009
    %v1011 = vlog2.pop %v1008
    %v1012 = vmul.f32 %v1011, 0.6931472
    %v1013 = vlog2.pop %v1010
    %v1014 = vmul.f32 %v1013, 0.6931472
    %v1015 = vsub.f32 %v999, %v1012
    %v1016 = vsub.f32 %v1000, %v1014
    %v1017 = vsel %vm992, %v1015, 0.0
    %v1018 = vsel %vm992, %v1016, 0.0
    %1019 = vst [vmem:[%s4] sm:$0xff] %v1017
    %1020 = vst [vmem:[%s4 + $0x8] sm:$0xff] %v1018
    // Predicated region
    $region22: #{net_forward.1} parent=1 // pred_check
      _
    $region23: #{net_forward.1} parent=1 // pred_check_branch
      %1022 = sbr.rel (0) target = $region25
    $region24: #{net_forward.1} parent=1 // pred_region
      _
    $region25: #{net_forward.1} parent=1 // pred_fallthru
      _
    // Predicated region
    $region26: #{net_forward.1} parent=1 // pred_check
      _
    $region27: #{net_forward.1} parent=1 // pred_check_branch
      %1024 = sbr.rel (0) target = $region29
    $region28: #{net_forward.1} parent=1 // pred_region
      _
    $region29: #{net_forward.1} parent=1 // pred_fallthru
      _
    %1025 = vsyncpa [#allocation3], 1

</llo_original>
